<compile_context>
chip_gen: v7x
topology: tpu7x:2x2x1
jax: 0.10.0
libtpu: 0.0.40
codegen_flags: <defaults>
</compile_context>

<pallas_src>
import jax
import jax.numpy as jnp
from jax import lax
from jax.experimental import pallas as pl
from jax.experimental.pallas import tpu as pltpu


def _embed_kernel(ids_ref, slot_ref, tok_hbm, pos_ref, map_ref, out_ref,
                  tok_buf, sems):
    # ids_ref : SMEM (B*S,) int32   flattened token ids       (scalar prefetch)
    # slot_ref: SMEM (B,)   int32   placeholder slot per row, -1 if none
    # tok_hbm : HBM  (V, D)         token embedding table (memory_space=pl.ANY)
    # pos_ref : VMEM (S, D)         position embeddings (resident across grid)
    # map_ref : VMEM (B, D)         mapper "word" outputs (resident)
    # out_ref : VMEM (S, D)         output tile for batch row b (B dim squeezed)
    # tok_buf : VMEM (2, S, D)      double-buffered gathered token rows
    # sems    : DMA semaphores (2,) one per buffer slot
    b = pl.program_id(0)
    nb = pl.num_programs(0)
    S, D = out_ref.shape
    cur = b % 2
    nxt = 1 - cur
    unroll = min(8, S)

    def start_row_gather(row, slot):
        # Issue S small (1, D) row DMAs HBM -> VMEM for batch row `row`.
        def body(s, _):
            tid = ids_ref[row * S + s]
            pltpu.make_async_copy(tok_hbm.at[pl.ds(tid, 1)],
                                  tok_buf.at[slot, pl.ds(s, 1)],
                                  sems.at[slot]).start()
            return None
        lax.fori_loop(0, S, body, None, unroll=unroll)

    def wait_row_gather(slot):
        # One (1, D)-sized wait per issued row copy; amounts balance exactly.
        def body(s, _):
            pltpu.make_async_copy(tok_hbm.at[pl.ds(0, 1)],
                                  tok_buf.at[slot, pl.ds(s, 1)],
                                  sems.at[slot]).wait()
            return None
        lax.fori_loop(0, S, body, None, unroll=unroll)

    # Read SMEM scalars before any DMA wait (.wait() breaks sst->sld fwd).
    slot_pos = slot_ref[b]

    # Prime the pipeline: row 0's gather is issued in step 0.
    @pl.when(b == 0)
    def _():
        start_row_gather(0, cur)

    # Lookahead: issue next row's gather before blocking on the current one,
    # hiding its latency behind this step's compute + output writeback.
    @pl.when(b + 1 < nb)
    def _():
        start_row_gather(b + 1, nxt)

    # Wait for the current row's token rows (started in the previous step,
    # or just above for b == 0).
    wait_row_gather(cur)

    # Overwrite the placeholder-token row with the mapper word embedding:
    # a single dynamic (1, D) row store. Skipped if the row has no
    # placeholder token (slot_pos == -1), matching PyTorch's masked assign.
    @pl.when(slot_pos >= 0)
    def _():
        tok_buf[cur, pl.ds(slot_pos, 1), :] = map_ref[pl.ds(b, 1), :]

    # Add position embeddings; lane/sublane-dense (S, D) store.
    out_ref[...] = (tok_buf[cur] + pos_ref[...]).astype(out_ref.dtype)


def neti_clip_text_embeddings(input_ids, placeholder_token_id,
                              token_emb, pos_emb, mapper_outputs):
    """Returns (embeddings (B, S, D), bypass_outputs (B, W//2))."""
    B, S = input_ids.shape
    V, D = token_emb.shape

    # output_bypass split, exactly as the PyTorch module does it.
    half = mapper_outputs.shape[1] // 2
    mapper_word = mapper_outputs[:, :half].astype(token_emb.dtype)
    bypass_outputs = mapper_outputs[:, half:].astype(token_emb.dtype)
    assert mapper_word.shape[1] == D, "mapper word width must equal hidden_size"

    # Scalar-prefetch operands: flat ids (minimal SMEM padding) and the
    # placeholder slot per batch row (-1 when a row has no placeholder;
    # NeTI normally has exactly one per row).
    ids_i32 = input_ids.astype(jnp.int32)
    is_ph = ids_i32 == jnp.int32(placeholder_token_id)
    has_ph = jnp.any(is_ph, axis=1)
    slots = jnp.where(has_ph, jnp.argmax(is_ph, axis=1), -1).astype(jnp.int32)
    ids_flat = ids_i32.reshape(-1)

    # position_ids = arange(S); slice once in the wrapper so the kernel sees a
    # full (S, D) resident block.
    pos_sliced = pos_emb[:S].astype(token_emb.dtype)

    grid_spec = pltpu.PrefetchScalarGridSpec(
        num_scalar_prefetch=2,          # (ids_flat, slots) -> SMEM
        grid=(B,),
        in_specs=[
            pl.BlockSpec(memory_space=pl.ANY),                 # token table, HBM
            pl.BlockSpec((S, D), lambda b, ids, sl: (0, 0)),   # pos, resident
            pl.BlockSpec((B, D), lambda b, ids, sl: (0, 0)),   # mapper words
        ],
        out_specs=pl.BlockSpec((pl.Squeezed(), S, D),
                               lambda b, ids, sl: (b, 0, 0)),
        scratch_shapes=[
            pltpu.VMEM((2, S, D), token_emb.dtype),
            pltpu.SemaphoreType.DMA((2,)),
        ],
    )

    itemsize = jnp.dtype(token_emb.dtype).itemsize
    bytes_accessed = itemsize * (B * S * D   # token row gather
                                 + S * D     # position embeddings
                                 + B * D     # mapper word rows
                                 + B * S * D)  # output writeback

    embeddings = pl.pallas_call(
        _embed_kernel,
        out_shape=jax.ShapeDtypeStruct((B, S, D), token_emb.dtype),
        grid_spec=grid_spec,
        compiler_params=pltpu.CompilerParams(
            # Manual cross-step prefetch carries state between grid steps,
            # so the batch axis must stay sequential.
            dimension_semantics=("arbitrary",)),
        cost_estimate=pl.CostEstimate(flops=B * S * D, transcendentals=0,
                                      bytes_accessed=bytes_accessed),
    )(ids_flat, slots, token_emb, pos_sliced, mapper_word)

    return embeddings, bypass_outputs


def _reference(input_ids, placeholder_token_id, token_emb, pos_emb,
               mapper_outputs):
    B, S = input_ids.shape
    half = mapper_outputs.shape[1] // 2
    mapper_word = mapper_outputs[:, :half].astype(token_emb.dtype)
    bypass = mapper_outputs[:, half:].astype(token_emb.dtype)
    inputs_embeds = token_emb[input_ids]                          # (B, S, D)
    is_ph = input_ids == placeholder_token_id
    has_ph = jnp.any(is_ph, axis=1)
    slots = jnp.argmax(is_ph, axis=1)
    rows = jnp.arange(B)
    new_rows = jnp.where(has_ph[:, None], mapper_word,
                         inputs_embeds[rows, slots])
    inputs_embeds = inputs_embeds.at[rows, slots].set(new_rows)
    pos = pos_emb[:S]                                             # (S, D)
    return inputs_embeds + pos[None], bypass


if __name__ == "__main__":
    # Small CLIPTextConfig-like dimensions.
    vocab_size = 48
    max_position_embeddings = 16
    hidden_size = 128
    B, S = 2, 8
    placeholder_token_id = vocab_size - 1

    key = jax.random.PRNGKey(0)
    k_tok, k_pos, k_ids, k_slot, k_w, k_b, k_t, k_u = jax.random.split(key, 8)

    # Deterministic "parameters" (module __init__ shapes).
    token_emb = jax.random.normal(k_tok, (vocab_size, hidden_size),
                                  dtype=jnp.float32) * 0.02
    pos_emb = jax.random.normal(k_pos, (max_position_embeddings, hidden_size),
                                dtype=jnp.float32) * 0.02

    # input_ids with exactly one placeholder token per row (NeTI assumption;
    # the kernel also tolerates rows with no placeholder).
    input_ids = jax.random.randint(k_ids, (B, S), 0, vocab_size - 1,
                                   dtype=jnp.int32)
    slot_pos = jax.random.randint(k_slot, (B,), 0, S, dtype=jnp.int32)
    input_ids = input_ids.at[jnp.arange(B), slot_pos].set(placeholder_token_id)

    # TODO(synk): NeTIMapper is an external module; it is approximated here by
    # a deterministic linear map over (timestep, unet_layer) in plain JAX.
    timesteps = jax.random.uniform(k_t, (B,), dtype=jnp.float32) * 1000.0
    unet_layers = jax.random.randint(k_u, (B,), 0, 16).astype(jnp.float32)
    mapper_w = jax.random.normal(k_w, (2, 2 * hidden_size),
                                 dtype=jnp.float32) * 0.01
    mapper_b = jax.random.normal(k_b, (2 * hidden_size,),
                                 dtype=jnp.float32) * 0.01
    mapper_in = jnp.stack([timesteps, unet_layers], axis=-1)     # (B, 2)
    mapper_outputs = mapper_in @ mapper_w + mapper_b             # (B, 2D)

    emb, bypass = neti_clip_text_embeddings(
        input_ids, placeholder_token_id, token_emb, pos_emb, mapper_outputs)
    emb = jax.block_until_ready(emb)
    bypass = jax.block_until_ready(bypass)

    emb_ref, bypass_ref = _reference(
        input_ids, placeholder_token_id, token_emb, pos_emb, mapper_outputs)

    assert emb.shape == (B, S, hidden_size)
    assert bypass.shape == (B, hidden_size)
    assert jnp.allclose(emb, emb_ref, atol=1e-5, rtol=1e-5)
    assert jnp.allclose(bypass, bypass_ref, atol=1e-5, rtol=1e-5)
    print("KERNEL_OK")
</pallas_src>

<mosaic_0001>
module attributes {stable_mosaic.version = 11 : i64} {
  func.func @_embed_kernel(%arg0: i32, %arg1: memref<16xi32, #tpu.memory_space<smem>>, %arg2: memref<2xi32, #tpu.memory_space<smem>>, %arg3: memref<48x128xf32, #tpu.memory_space<any>>, %arg4: memref<8x128xf32, #tpu.memory_space<vmem>>, %arg5: memref<2x128xf32, #tpu.memory_space<vmem>>, %arg6: memref<1x8x128xf32, #tpu.memory_space<vmem>>, %arg7: memref<2x8x128xf32, #tpu.memory_space<vmem>>, %arg8: memref<2x!tpu.dma_semaphore, #tpu.memory_space<semaphore_mem>>) attributes {dimension_semantics = [#tpu.dimension_semantics<arbitrary>], iteration_bounds = array<i64: 2>, scalar_prefetch = 2 : i64, scratch_operands = 2 : i64, tpu.core_type = #tpu.core_type<tc>, window_params = [{}, {pipeline_mode = #tpu.pipeline_mode<synchronous>, transform_indices = @transform_1, window_bounds = array<i64: 8, 128>}, {pipeline_mode = #tpu.pipeline_mode<synchronous>, transform_indices = @transform_2, window_bounds = array<i64: 2, 128>}, {transform_indices = @transform_3, window_bounds = array<i64: 1, 8, 128>}]} {
    %c2_i32 = arith.constant 2 : i32
    %c0_i32 = arith.constant 0 : i32
    %0 = arith.cmpi eq, %c2_i32, %c0_i32 : i32
    %c1_i32 = arith.constant 1 : i32
    %1 = arith.select %0, %c1_i32, %c2_i32 : i32
    %2 = arith.remsi %arg0, %1 : i32
    %c0_i32_0 = arith.constant 0 : i32
    %3 = arith.cmpi ne, %2, %c0_i32_0 : i32
    %c0_i32_1 = arith.constant 0 : i32
    %4 = arith.cmpi slt, %2, %c0_i32_1 : i32
    %c0_i32_2 = arith.constant 0 : i32
    %5 = arith.cmpi slt, %1, %c0_i32_2 : i32
    %6 = arith.xori %4, %5 : i1
    %7 = arith.andi %6, %3 : i1
    %8 = arith.addi %2, %1 : i32
    %9 = arith.select %7, %8, %2 : i32
    %c1_i32_3 = arith.constant 1 : i32
    %10 = arith.subi %c1_i32_3, %9 : i32
    %11 = arith.index_cast %arg0 : i32 to index
    %12 = memref.load %arg2[%11] : memref<2xi32, #tpu.memory_space<smem>>
    %c0_i32_4 = arith.constant 0 : i32
    %13 = arith.cmpi eq, %arg0, %c0_i32_4 : i32
    %14 = arith.extui %13 : i1 to i32
    %c0_i32_5 = arith.constant 0 : i32
    %15 = arith.cmpi ne, %14, %c0_i32_5 : i32
    scf.if %15 {
      %c0_i32_44 = arith.constant 0 : i32
      %c0_i32_45 = arith.constant 0 : i32
      %71 = arith.addi %c0_i32_45, %c0_i32_44 : i32
      %72 = arith.index_cast %71 : i32 to index
      %73 = memref.load %arg1[%72] : memref<16xi32, #tpu.memory_space<smem>>
      %c0_i32_46 = arith.constant 0 : i32
      %74 = tpu.memref_slice %arg3[%73, %c0_i32_46] : memref<48x128xf32, #tpu.memory_space<any>> -> memref<1x128xf32, #tpu.memory_space<any>>
      %c0_i32_47 = arith.constant 0 : i32
      %75 = tpu.memref_slice %arg7[%9, %c0_i32_44, %c0_i32_47] : memref<2x8x128xf32, #tpu.memory_space<vmem>> -> memref<1x1x128xf32, #tpu.memory_space<vmem>>
      %76 = tpu.memref_squeeze %75 : memref<1x1x128xf32, #tpu.memory_space<vmem>> -> memref<1x128xf32, #tpu.memory_space<vmem>>
      %77 = tpu.memref_slice %arg8[%9] : memref<2x!tpu.dma_semaphore, #tpu.memory_space<semaphore_mem>> -> memref<1x!tpu.dma_semaphore, #tpu.memory_space<semaphore_mem>>
      %78 = tpu.memref_squeeze %77 : memref<1x!tpu.dma_semaphore, #tpu.memory_space<semaphore_mem>> -> memref<!tpu.dma_semaphore, #tpu.memory_space<semaphore_mem>>
      tpu.enqueue_dma source(%74 : memref<1x128xf32, #tpu.memory_space<any>>) target(%76 : memref<1x128xf32, #tpu.memory_space<vmem>>) target_semaphore(%78 : memref<!tpu.dma_semaphore, #tpu.memory_space<semaphore_mem>>)
      %c1_i32_48 = arith.constant 1 : i32
      %c0_i32_49 = arith.constant 0 : i32
      %79 = arith.addi %c0_i32_49, %c1_i32_48 : i32
      %80 = arith.index_cast %79 : i32 to index
      %81 = memref.load %arg1[%80] : memref<16xi32, #tpu.memory_space<smem>>
      %c0_i32_50 = arith.constant 0 : i32
      %82 = tpu.memref_slice %arg3[%81, %c0_i32_50] : memref<48x128xf32, #tpu.memory_space<any>> -> memref<1x128xf32, #tpu.memory_space<any>>
      %c0_i32_51 = arith.constant 0 : i32
      %83 = tpu.memref_slice %arg7[%9, %c1_i32_48, %c0_i32_51] : memref<2x8x128xf32, #tpu.memory_space<vmem>> -> memref<1x1x128xf32, #tpu.memory_space<vmem>>
      %84 = tpu.memref_squeeze %83 : memref<1x1x128xf32, #tpu.memory_space<vmem>> -> memref<1x128xf32, #tpu.memory_space<vmem>>
      %85 = tpu.memref_slice %arg8[%9] : memref<2x!tpu.dma_semaphore, #tpu.memory_space<semaphore_mem>> -> memref<1x!tpu.dma_semaphore, #tpu.memory_space<semaphore_mem>>
      %86 = tpu.memref_squeeze %85 : memref<1x!tpu.dma_semaphore, #tpu.memory_space<semaphore_mem>> -> memref<!tpu.dma_semaphore, #tpu.memory_space<semaphore_mem>>
      tpu.enqueue_dma source(%82 : memref<1x128xf32, #tpu.memory_space<any>>) target(%84 : memref<1x128xf32, #tpu.memory_space<vmem>>) target_semaphore(%86 : memref<!tpu.dma_semaphore, #tpu.memory_space<semaphore_mem>>)
      %c2_i32_52 = arith.constant 2 : i32
      %c0_i32_53 = arith.constant 0 : i32
      %87 = arith.addi %c0_i32_53, %c2_i32_52 : i32
      %88 = arith.index_cast %87 : i32 to index
      %89 = memref.load %arg1[%88] : memref<16xi32, #tpu.memory_space<smem>>
      %c0_i32_54 = arith.constant 0 : i32
      %90 = tpu.memref_slice %arg3[%89, %c0_i32_54] : memref<48x128xf32, #tpu.memory_space<any>> -> memref<1x128xf32, #tpu.memory_space<any>>
      %c0_i32_55 = arith.constant 0 : i32
      %91 = tpu.memref_slice %arg7[%9, %c2_i32_52, %c0_i32_55] : memref<2x8x128xf32, #tpu.memory_space<vmem>> -> memref<1x1x128xf32, #tpu.memory_space<vmem>>
      %92 = tpu.memref_squeeze %91 : memref<1x1x128xf32, #tpu.memory_space<vmem>> -> memref<1x128xf32, #tpu.memory_space<vmem>>
      %93 = tpu.memref_slice %arg8[%9] : memref<2x!tpu.dma_semaphore, #tpu.memory_space<semaphore_mem>> -> memref<1x!tpu.dma_semaphore, #tpu.memory_space<semaphore_mem>>
      %94 = tpu.memref_squeeze %93 : memref<1x!tpu.dma_semaphore, #tpu.memory_space<semaphore_mem>> -> memref<!tpu.dma_semaphore, #tpu.memory_space<semaphore_mem>>
      tpu.enqueue_dma source(%90 : memref<1x128xf32, #tpu.memory_space<any>>) target(%92 : memref<1x128xf32, #tpu.memory_space<vmem>>) target_semaphore(%94 : memref<!tpu.dma_semaphore, #tpu.memory_space<semaphore_mem>>)
      %c3_i32_56 = arith.constant 3 : i32
      %c0_i32_57 = arith.constant 0 : i32
      %95 = arith.addi %c0_i32_57, %c3_i32_56 : i32
      %96 = arith.index_cast %95 : i32 to index
      %97 = memref.load %arg1[%96] : memref<16xi32, #tpu.memory_space<smem>>
      %c0_i32_58 = arith.constant 0 : i32
      %98 = tpu.memref_slice %arg3[%97, %c0_i32_58] : memref<48x128xf32, #tpu.memory_space<any>> -> memref<1x128xf32, #tpu.memory_space<any>>
      %c0_i32_59 = arith.constant 0 : i32
      %99 = tpu.memref_slice %arg7[%9, %c3_i32_56, %c0_i32_59] : memref<2x8x128xf32, #tpu.memory_space<vmem>> -> memref<1x1x128xf32, #tpu.memory_space<vmem>>
      %100 = tpu.memref_squeeze %99 : memref<1x1x128xf32, #tpu.memory_space<vmem>> -> memref<1x128xf32, #tpu.memory_space<vmem>>
      %101 = tpu.memref_slice %arg8[%9] : memref<2x!tpu.dma_semaphore, #tpu.memory_space<semaphore_mem>> -> memref<1x!tpu.dma_semaphore, #tpu.memory_space<semaphore_mem>>
      %102 = tpu.memref_squeeze %101 : memref<1x!tpu.dma_semaphore, #tpu.memory_space<semaphore_mem>> -> memref<!tpu.dma_semaphore, #tpu.memory_space<semaphore_mem>>
      tpu.enqueue_dma source(%98 : memref<1x128xf32, #tpu.memory_space<any>>) target(%100 : memref<1x128xf32, #tpu.memory_space<vmem>>) target_semaphore(%102 : memref<!tpu.dma_semaphore, #tpu.memory_space<semaphore_mem>>)
      %c4_i32_60 = arith.constant 4 : i32
      %c0_i32_61 = arith.constant 0 : i32
      %103 = arith.addi %c0_i32_61, %c4_i32_60 : i32
      %104 = arith.index_cast %103 : i32 to index
      %105 = memref.load %arg1[%104] : memref<16xi32, #tpu.memory_space<smem>>
      %c0_i32_62 = arith.constant 0 : i32
      %106 = tpu.memref_slice %arg3[%105, %c0_i32_62] : memref<48x128xf32, #tpu.memory_space<any>> -> memref<1x128xf32, #tpu.memory_space<any>>
      %c0_i32_63 = arith.constant 0 : i32
      %107 = tpu.memref_slice %arg7[%9, %c4_i32_60, %c0_i32_63] : memref<2x8x128xf32, #tpu.memory_space<vmem>> -> memref<1x1x128xf32, #tpu.memory_space<vmem>>
      %108 = tpu.memref_squeeze %107 : memref<1x1x128xf32, #tpu.memory_space<vmem>> -> memref<1x128xf32, #tpu.memory_space<vmem>>
      %109 = tpu.memref_slice %arg8[%9] : memref<2x!tpu.dma_semaphore, #tpu.memory_space<semaphore_mem>> -> memref<1x!tpu.dma_semaphore, #tpu.memory_space<semaphore_mem>>
      %110 = tpu.memref_squeeze %109 : memref<1x!tpu.dma_semaphore, #tpu.memory_space<semaphore_mem>> -> memref<!tpu.dma_semaphore, #tpu.memory_space<semaphore_mem>>
      tpu.enqueue_dma source(%106 : memref<1x128xf32, #tpu.memory_space<any>>) target(%108 : memref<1x128xf32, #tpu.memory_space<vmem>>) target_semaphore(%110 : memref<!tpu.dma_semaphore, #tpu.memory_space<semaphore_mem>>)
      %c5_i32_64 = arith.constant 5 : i32
      %c0_i32_65 = arith.constant 0 : i32
      %111 = arith.addi %c0_i32_65, %c5_i32_64 : i32
      %112 = arith.index_cast %111 : i32 to index
      %113 = memref.load %arg1[%112] : memref<16xi32, #tpu.memory_space<smem>>
      %c0_i32_66 = arith.constant 0 : i32
      %114 = tpu.memref_slice %arg3[%113, %c0_i32_66] : memref<48x128xf32, #tpu.memory_space<any>> -> memref<1x128xf32, #tpu.memory_space<any>>
      %c0_i32_67 = arith.constant 0 : i32
      %115 = tpu.memref_slice %arg7[%9, %c5_i32_64, %c0_i32_67] : memref<2x8x128xf32, #tpu.memory_space<vmem>> -> memref<1x1x128xf32, #tpu.memory_space<vmem>>
      %116 = tpu.memref_squeeze %115 : memref<1x1x128xf32, #tpu.memory_space<vmem>> -> memref<1x128xf32, #tpu.memory_space<vmem>>
      %117 = tpu.memref_slice %arg8[%9] : memref<2x!tpu.dma_semaphore, #tpu.memory_space<semaphore_mem>> -> memref<1x!tpu.dma_semaphore, #tpu.memory_space<semaphore_mem>>
      %118 = tpu.memref_squeeze %117 : memref<1x!tpu.dma_semaphore, #tpu.memory_space<semaphore_mem>> -> memref<!tpu.dma_semaphore, #tpu.memory_space<semaphore_mem>>
      tpu.enqueue_dma source(%114 : memref<1x128xf32, #tpu.memory_space<any>>) target(%116 : memref<1x128xf32, #tpu.memory_space<vmem>>) target_semaphore(%118 : memref<!tpu.dma_semaphore, #tpu.memory_space<semaphore_mem>>)
      %c6_i32_68 = arith.constant 6 : i32
      %c0_i32_69 = arith.constant 0 : i32
      %119 = arith.addi %c0_i32_69, %c6_i32_68 : i32
      %120 = arith.index_cast %119 : i32 to index
      %121 = memref.load %arg1[%120] : memref<16xi32, #tpu.memory_space<smem>>
      %c0_i32_70 = arith.constant 0 : i32
      %122 = tpu.memref_slice %arg3[%121, %c0_i32_70] : memref<48x128xf32, #tpu.memory_space<any>> -> memref<1x128xf32, #tpu.memory_space<any>>
      %c0_i32_71 = arith.constant 0 : i32
      %123 = tpu.memref_slice %arg7[%9, %c6_i32_68, %c0_i32_71] : memref<2x8x128xf32, #tpu.memory_space<vmem>> -> memref<1x1x128xf32, #tpu.memory_space<vmem>>
      %124 = tpu.memref_squeeze %123 : memref<1x1x128xf32, #tpu.memory_space<vmem>> -> memref<1x128xf32, #tpu.memory_space<vmem>>
      %125 = tpu.memref_slice %arg8[%9] : memref<2x!tpu.dma_semaphore, #tpu.memory_space<semaphore_mem>> -> memref<1x!tpu.dma_semaphore, #tpu.memory_space<semaphore_mem>>
      %126 = tpu.memref_squeeze %125 : memref<1x!tpu.dma_semaphore, #tpu.memory_space<semaphore_mem>> -> memref<!tpu.dma_semaphore, #tpu.memory_space<semaphore_mem>>
      tpu.enqueue_dma source(%122 : memref<1x128xf32, #tpu.memory_space<any>>) target(%124 : memref<1x128xf32, #tpu.memory_space<vmem>>) target_semaphore(%126 : memref<!tpu.dma_semaphore, #tpu.memory_space<semaphore_mem>>)
      %c7_i32_72 = arith.constant 7 : i32
      %c0_i32_73 = arith.constant 0 : i32
      %127 = arith.addi %c0_i32_73, %c7_i32_72 : i32
      %128 = arith.index_cast %127 : i32 to index
      %129 = memref.load %arg1[%128] : memref<16xi32, #tpu.memory_space<smem>>
      %c0_i32_74 = arith.constant 0 : i32
      %130 = tpu.memref_slice %arg3[%129, %c0_i32_74] : memref<48x128xf32, #tpu.memory_space<any>> -> memref<1x128xf32, #tpu.memory_space<any>>
      %c0_i32_75 = arith.constant 0 : i32
      %131 = tpu.memref_slice %arg7[%9, %c7_i32_72, %c0_i32_75] : memref<2x8x128xf32, #tpu.memory_space<vmem>> -> memref<1x1x128xf32, #tpu.memory_space<vmem>>
      %132 = tpu.memref_squeeze %131 : memref<1x1x128xf32, #tpu.memory_space<vmem>> -> memref<1x128xf32, #tpu.memory_space<vmem>>
      %133 = tpu.memref_slice %arg8[%9] : memref<2x!tpu.dma_semaphore, #tpu.memory_space<semaphore_mem>> -> memref<1x!tpu.dma_semaphore, #tpu.memory_space<semaphore_mem>>
      %134 = tpu.memref_squeeze %133 : memref<1x!tpu.dma_semaphore, #tpu.memory_space<semaphore_mem>> -> memref<!tpu.dma_semaphore, #tpu.memory_space<semaphore_mem>>
      tpu.enqueue_dma source(%130 : memref<1x128xf32, #tpu.memory_space<any>>) target(%132 : memref<1x128xf32, #tpu.memory_space<vmem>>) target_semaphore(%134 : memref<!tpu.dma_semaphore, #tpu.memory_space<semaphore_mem>>)
      %c8_i32_76 = arith.constant 8 : i32
    } else {
    }
    %c1_i32_6 = arith.constant 1 : i32
    %16 = arith.addi %arg0, %c1_i32_6 : i32
    %c2_i32_7 = arith.constant 2 : i32
    %17 = arith.cmpi slt, %16, %c2_i32_7 : i32
    %18 = arith.extui %17 : i1 to i32
    %c0_i32_8 = arith.constant 0 : i32
    %19 = arith.cmpi ne, %18, %c0_i32_8 : i32
    scf.if %19 {
      %c1_i32_44 = arith.constant 1 : i32
      %71 = arith.addi %arg0, %c1_i32_44 : i32
      %c0_i32_45 = arith.constant 0 : i32
      %c8_i32_46 = arith.constant 8 : i32
      %72 = arith.muli %71, %c8_i32_46 : i32
      %73 = arith.addi %72, %c0_i32_45 : i32
      %74 = arith.index_cast %73 : i32 to index
      %75 = memref.load %arg1[%74] : memref<16xi32, #tpu.memory_space<smem>>
      %c0_i32_47 = arith.constant 0 : i32
      %76 = tpu.memref_slice %arg3[%75, %c0_i32_47] : memref<48x128xf32, #tpu.memory_space<any>> -> memref<1x128xf32, #tpu.memory_space<any>>
      %c0_i32_48 = arith.constant 0 : i32
      %77 = tpu.memref_slice %arg7[%10, %c0_i32_45, %c0_i32_48] : memref<2x8x128xf32, #tpu.memory_space<vmem>> -> memref<1x1x128xf32, #tpu.memory_space<vmem>>
      %78 = tpu.memref_squeeze %77 : memref<1x1x128xf32, #tpu.memory_space<vmem>> -> memref<1x128xf32, #tpu.memory_space<vmem>>
      %79 = tpu.memref_slice %arg8[%10] : memref<2x!tpu.dma_semaphore, #tpu.memory_space<semaphore_mem>> -> memref<1x!tpu.dma_semaphore, #tpu.memory_space<semaphore_mem>>
      %80 = tpu.memref_squeeze %79 : memref<1x!tpu.dma_semaphore, #tpu.memory_space<semaphore_mem>> -> memref<!tpu.dma_semaphore, #tpu.memory_space<semaphore_mem>>
      tpu.enqueue_dma source(%76 : memref<1x128xf32, #tpu.memory_space<any>>) target(%78 : memref<1x128xf32, #tpu.memory_space<vmem>>) target_semaphore(%80 : memref<!tpu.dma_semaphore, #tpu.memory_space<semaphore_mem>>)
      %c1_i32_49 = arith.constant 1 : i32
      %c8_i32_50 = arith.constant 8 : i32
      %81 = arith.muli %71, %c8_i32_50 : i32
      %82 = arith.addi %81, %c1_i32_49 : i32
      %83 = arith.index_cast %82 : i32 to index
      %84 = memref.load %arg1[%83] : memref<16xi32, #tpu.memory_space<smem>>
      %c0_i32_51 = arith.constant 0 : i32
      %85 = tpu.memref_slice %arg3[%84, %c0_i32_51] : memref<48x128xf32, #tpu.memory_space<any>> -> memref<1x128xf32, #tpu.memory_space<any>>
      %c0_i32_52 = arith.constant 0 : i32
      %86 = tpu.memref_slice %arg7[%10, %c1_i32_49, %c0_i32_52] : memref<2x8x128xf32, #tpu.memory_space<vmem>> -> memref<1x1x128xf32, #tpu.memory_space<vmem>>
      %87 = tpu.memref_squeeze %86 : memref<1x1x128xf32, #tpu.memory_space<vmem>> -> memref<1x128xf32, #tpu.memory_space<vmem>>
      %88 = tpu.memref_slice %arg8[%10] : memref<2x!tpu.dma_semaphore, #tpu.memory_space<semaphore_mem>> -> memref<1x!tpu.dma_semaphore, #tpu.memory_space<semaphore_mem>>
      %89 = tpu.memref_squeeze %88 : memref<1x!tpu.dma_semaphore, #tpu.memory_space<semaphore_mem>> -> memref<!tpu.dma_semaphore, #tpu.memory_space<semaphore_mem>>
      tpu.enqueue_dma source(%85 : memref<1x128xf32, #tpu.memory_space<any>>) target(%87 : memref<1x128xf32, #tpu.memory_space<vmem>>) target_semaphore(%89 : memref<!tpu.dma_semaphore, #tpu.memory_space<semaphore_mem>>)
      %c2_i32_53 = arith.constant 2 : i32
      %c8_i32_54 = arith.constant 8 : i32
      %90 = arith.muli %71, %c8_i32_54 : i32
      %91 = arith.addi %90, %c2_i32_53 : i32
      %92 = arith.index_cast %91 : i32 to index
      %93 = memref.load %arg1[%92] : memref<16xi32, #tpu.memory_space<smem>>
      %c0_i32_55 = arith.constant 0 : i32
      %94 = tpu.memref_slice %arg3[%93, %c0_i32_55] : memref<48x128xf32, #tpu.memory_space<any>> -> memref<1x128xf32, #tpu.memory_space<any>>
      %c0_i32_56 = arith.constant 0 : i32
      %95 = tpu.memref_slice %arg7[%10, %c2_i32_53, %c0_i32_56] : memref<2x8x128xf32, #tpu.memory_space<vmem>> -> memref<1x1x128xf32, #tpu.memory_space<vmem>>
      %96 = tpu.memref_squeeze %95 : memref<1x1x128xf32, #tpu.memory_space<vmem>> -> memref<1x128xf32, #tpu.memory_space<vmem>>
      %97 = tpu.memref_slice %arg8[%10] : memref<2x!tpu.dma_semaphore, #tpu.memory_space<semaphore_mem>> -> memref<1x!tpu.dma_semaphore, #tpu.memory_space<semaphore_mem>>
      %98 = tpu.memref_squeeze %97 : memref<1x!tpu.dma_semaphore, #tpu.memory_space<semaphore_mem>> -> memref<!tpu.dma_semaphore, #tpu.memory_space<semaphore_mem>>
      tpu.enqueue_dma source(%94 : memref<1x128xf32, #tpu.memory_space<any>>) target(%96 : memref<1x128xf32, #tpu.memory_space<vmem>>) target_semaphore(%98 : memref<!tpu.dma_semaphore, #tpu.memory_space<semaphore_mem>>)
      %c3_i32_57 = arith.constant 3 : i32
      %c8_i32_58 = arith.constant 8 : i32
      %99 = arith.muli %71, %c8_i32_58 : i32
      %100 = arith.addi %99, %c3_i32_57 : i32
      %101 = arith.index_cast %100 : i32 to index
      %102 = memref.load %arg1[%101] : memref<16xi32, #tpu.memory_space<smem>>
      %c0_i32_59 = arith.constant 0 : i32
      %103 = tpu.memref_slice %arg3[%102, %c0_i32_59] : memref<48x128xf32, #tpu.memory_space<any>> -> memref<1x128xf32, #tpu.memory_space<any>>
      %c0_i32_60 = arith.constant 0 : i32
      %104 = tpu.memref_slice %arg7[%10, %c3_i32_57, %c0_i32_60] : memref<2x8x128xf32, #tpu.memory_space<vmem>> -> memref<1x1x128xf32, #tpu.memory_space<vmem>>
      %105 = tpu.memref_squeeze %104 : memref<1x1x128xf32, #tpu.memory_space<vmem>> -> memref<1x128xf32, #tpu.memory_space<vmem>>
      %106 = tpu.memref_slice %arg8[%10] : memref<2x!tpu.dma_semaphore, #tpu.memory_space<semaphore_mem>> -> memref<1x!tpu.dma_semaphore, #tpu.memory_space<semaphore_mem>>
      %107 = tpu.memref_squeeze %106 : memref<1x!tpu.dma_semaphore, #tpu.memory_space<semaphore_mem>> -> memref<!tpu.dma_semaphore, #tpu.memory_space<semaphore_mem>>
      tpu.enqueue_dma source(%103 : memref<1x128xf32, #tpu.memory_space<any>>) target(%105 : memref<1x128xf32, #tpu.memory_space<vmem>>) target_semaphore(%107 : memref<!tpu.dma_semaphore, #tpu.memory_space<semaphore_mem>>)
      %c4_i32_61 = arith.constant 4 : i32
      %c8_i32_62 = arith.constant 8 : i32
      %108 = arith.muli %71, %c8_i32_62 : i32
      %109 = arith.addi %108, %c4_i32_61 : i32
      %110 = arith.index_cast %109 : i32 to index
      %111 = memref.load %arg1[%110] : memref<16xi32, #tpu.memory_space<smem>>
      %c0_i32_63 = arith.constant 0 : i32
      %112 = tpu.memref_slice %arg3[%111, %c0_i32_63] : memref<48x128xf32, #tpu.memory_space<any>> -> memref<1x128xf32, #tpu.memory_space<any>>
      %c0_i32_64 = arith.constant 0 : i32
      %113 = tpu.memref_slice %arg7[%10, %c4_i32_61, %c0_i32_64] : memref<2x8x128xf32, #tpu.memory_space<vmem>> -> memref<1x1x128xf32, #tpu.memory_space<vmem>>
      %114 = tpu.memref_squeeze %113 : memref<1x1x128xf32, #tpu.memory_space<vmem>> -> memref<1x128xf32, #tpu.memory_space<vmem>>
      %115 = tpu.memref_slice %arg8[%10] : memref<2x!tpu.dma_semaphore, #tpu.memory_space<semaphore_mem>> -> memref<1x!tpu.dma_semaphore, #tpu.memory_space<semaphore_mem>>
      %116 = tpu.memref_squeeze %115 : memref<1x!tpu.dma_semaphore, #tpu.memory_space<semaphore_mem>> -> memref<!tpu.dma_semaphore, #tpu.memory_space<semaphore_mem>>
      tpu.enqueue_dma source(%112 : memref<1x128xf32, #tpu.memory_space<any>>) target(%114 : memref<1x128xf32, #tpu.memory_space<vmem>>) target_semaphore(%116 : memref<!tpu.dma_semaphore, #tpu.memory_space<semaphore_mem>>)
      %c5_i32_65 = arith.constant 5 : i32
      %c8_i32_66 = arith.constant 8 : i32
      %117 = arith.muli %71, %c8_i32_66 : i32
      %118 = arith.addi %117, %c5_i32_65 : i32
      %119 = arith.index_cast %118 : i32 to index
      %120 = memref.load %arg1[%119] : memref<16xi32, #tpu.memory_space<smem>>
      %c0_i32_67 = arith.constant 0 : i32
      %121 = tpu.memref_slice %arg3[%120, %c0_i32_67] : memref<48x128xf32, #tpu.memory_space<any>> -> memref<1x128xf32, #tpu.memory_space<any>>
      %c0_i32_68 = arith.constant 0 : i32
      %122 = tpu.memref_slice %arg7[%10, %c5_i32_65, %c0_i32_68] : memref<2x8x128xf32, #tpu.memory_space<vmem>> -> memref<1x1x128xf32, #tpu.memory_space<vmem>>
      %123 = tpu.memref_squeeze %122 : memref<1x1x128xf32, #tpu.memory_space<vmem>> -> memref<1x128xf32, #tpu.memory_space<vmem>>
      %124 = tpu.memref_slice %arg8[%10] : memref<2x!tpu.dma_semaphore, #tpu.memory_space<semaphore_mem>> -> memref<1x!tpu.dma_semaphore, #tpu.memory_space<semaphore_mem>>
      %125 = tpu.memref_squeeze %124 : memref<1x!tpu.dma_semaphore, #tpu.memory_space<semaphore_mem>> -> memref<!tpu.dma_semaphore, #tpu.memory_space<semaphore_mem>>
      tpu.enqueue_dma source(%121 : memref<1x128xf32, #tpu.memory_space<any>>) target(%123 : memref<1x128xf32, #tpu.memory_space<vmem>>) target_semaphore(%125 : memref<!tpu.dma_semaphore, #tpu.memory_space<semaphore_mem>>)
      %c6_i32_69 = arith.constant 6 : i32
      %c8_i32_70 = arith.constant 8 : i32
      %126 = arith.muli %71, %c8_i32_70 : i32
      %127 = arith.addi %126, %c6_i32_69 : i32
      %128 = arith.index_cast %127 : i32 to index
      %129 = memref.load %arg1[%128] : memref<16xi32, #tpu.memory_space<smem>>
      %c0_i32_71 = arith.constant 0 : i32
      %130 = tpu.memref_slice %arg3[%129, %c0_i32_71] : memref<48x128xf32, #tpu.memory_space<any>> -> memref<1x128xf32, #tpu.memory_space<any>>
      %c0_i32_72 = arith.constant 0 : i32
      %131 = tpu.memref_slice %arg7[%10, %c6_i32_69, %c0_i32_72] : memref<2x8x128xf32, #tpu.memory_space<vmem>> -> memref<1x1x128xf32, #tpu.memory_space<vmem>>
      %132 = tpu.memref_squeeze %131 : memref<1x1x128xf32, #tpu.memory_space<vmem>> -> memref<1x128xf32, #tpu.memory_space<vmem>>
      %133 = tpu.memref_slice %arg8[%10] : memref<2x!tpu.dma_semaphore, #tpu.memory_space<semaphore_mem>> -> memref<1x!tpu.dma_semaphore, #tpu.memory_space<semaphore_mem>>
      %134 = tpu.memref_squeeze %133 : memref<1x!tpu.dma_semaphore, #tpu.memory_space<semaphore_mem>> -> memref<!tpu.dma_semaphore, #tpu.memory_space<semaphore_mem>>
      tpu.enqueue_dma source(%130 : memref<1x128xf32, #tpu.memory_space<any>>) target(%132 : memref<1x128xf32, #tpu.memory_space<vmem>>) target_semaphore(%134 : memref<!tpu.dma_semaphore, #tpu.memory_space<semaphore_mem>>)
      %c7_i32_73 = arith.constant 7 : i32
      %c8_i32_74 = arith.constant 8 : i32
      %135 = arith.muli %71, %c8_i32_74 : i32
      %136 = arith.addi %135, %c7_i32_73 : i32
      %137 = arith.index_cast %136 : i32 to index
      %138 = memref.load %arg1[%137] : memref<16xi32, #tpu.memory_space<smem>>
      %c0_i32_75 = arith.constant 0 : i32
      %139 = tpu.memref_slice %arg3[%138, %c0_i32_75] : memref<48x128xf32, #tpu.memory_space<any>> -> memref<1x128xf32, #tpu.memory_space<any>>
      %c0_i32_76 = arith.constant 0 : i32
      %140 = tpu.memref_slice %arg7[%10, %c7_i32_73, %c0_i32_76] : memref<2x8x128xf32, #tpu.memory_space<vmem>> -> memref<1x1x128xf32, #tpu.memory_space<vmem>>
      %141 = tpu.memref_squeeze %140 : memref<1x1x128xf32, #tpu.memory_space<vmem>> -> memref<1x128xf32, #tpu.memory_space<vmem>>
      %142 = tpu.memref_slice %arg8[%10] : memref<2x!tpu.dma_semaphore, #tpu.memory_space<semaphore_mem>> -> memref<1x!tpu.dma_semaphore, #tpu.memory_space<semaphore_mem>>
      %143 = tpu.memref_squeeze %142 : memref<1x!tpu.dma_semaphore, #tpu.memory_space<semaphore_mem>> -> memref<!tpu.dma_semaphore, #tpu.memory_space<semaphore_mem>>
      tpu.enqueue_dma source(%139 : memref<1x128xf32, #tpu.memory_space<any>>) target(%141 : memref<1x128xf32, #tpu.memory_space<vmem>>) target_semaphore(%143 : memref<!tpu.dma_semaphore, #tpu.memory_space<semaphore_mem>>)
      %c8_i32_77 = arith.constant 8 : i32
    } else {
    }
    %c0_i32_9 = arith.constant 0 : i32
    %c0_i32_10 = arith.constant 0 : i32
    %c0_i32_11 = arith.constant 0 : i32
    %20 = tpu.memref_slice %arg3[%c0_i32_10, %c0_i32_11] : memref<48x128xf32, #tpu.memory_space<any>> -> memref<1x128xf32, #tpu.memory_space<any>>
    %c0_i32_12 = arith.constant 0 : i32
    %21 = tpu.memref_slice %arg7[%9, %c0_i32_9, %c0_i32_12] : memref<2x8x128xf32, #tpu.memory_space<vmem>> -> memref<1x1x128xf32, #tpu.memory_space<vmem>>
    %22 = tpu.memref_squeeze %21 : memref<1x1x128xf32, #tpu.memory_space<vmem>> -> memref<1x128xf32, #tpu.memory_space<vmem>>
    %23 = tpu.memref_slice %arg8[%9] : memref<2x!tpu.dma_semaphore, #tpu.memory_space<semaphore_mem>> -> memref<1x!tpu.dma_semaphore, #tpu.memory_space<semaphore_mem>>
    %24 = tpu.memref_squeeze %23 : memref<1x!tpu.dma_semaphore, #tpu.memory_space<semaphore_mem>> -> memref<!tpu.dma_semaphore, #tpu.memory_space<semaphore_mem>>
    tpu.wait_dma2 semaphore(%24 : memref<!tpu.dma_semaphore, #tpu.memory_space<semaphore_mem>>) src(%20 : memref<1x128xf32, #tpu.memory_space<any>>) dst(%22 : memref<1x128xf32, #tpu.memory_space<vmem>>)
    %c1_i32_13 = arith.constant 1 : i32
    %c0_i32_14 = arith.constant 0 : i32
    %c0_i32_15 = arith.constant 0 : i32
    %25 = tpu.memref_slice %arg3[%c0_i32_14, %c0_i32_15] : memref<48x128xf32, #tpu.memory_space<any>> -> memref<1x128xf32, #tpu.memory_space<any>>
    %c0_i32_16 = arith.constant 0 : i32
    %26 = tpu.memref_slice %arg7[%9, %c1_i32_13, %c0_i32_16] : memref<2x8x128xf32, #tpu.memory_space<vmem>> -> memref<1x1x128xf32, #tpu.memory_space<vmem>>
    %27 = tpu.memref_squeeze %26 : memref<1x1x128xf32, #tpu.memory_space<vmem>> -> memref<1x128xf32, #tpu.memory_space<vmem>>
    %28 = tpu.memref_slice %arg8[%9] : memref<2x!tpu.dma_semaphore, #tpu.memory_space<semaphore_mem>> -> memref<1x!tpu.dma_semaphore, #tpu.memory_space<semaphore_mem>>
    %29 = tpu.memref_squeeze %28 : memref<1x!tpu.dma_semaphore, #tpu.memory_space<semaphore_mem>> -> memref<!tpu.dma_semaphore, #tpu.memory_space<semaphore_mem>>
    tpu.wait_dma2 semaphore(%29 : memref<!tpu.dma_semaphore, #tpu.memory_space<semaphore_mem>>) src(%25 : memref<1x128xf32, #tpu.memory_space<any>>) dst(%27 : memref<1x128xf32, #tpu.memory_space<vmem>>)
    %c2_i32_17 = arith.constant 2 : i32
    %c0_i32_18 = arith.constant 0 : i32
    %c0_i32_19 = arith.constant 0 : i32
    %30 = tpu.memref_slice %arg3[%c0_i32_18, %c0_i32_19] : memref<48x128xf32, #tpu.memory_space<any>> -> memref<1x128xf32, #tpu.memory_space<any>>
    %c0_i32_20 = arith.constant 0 : i32
    %31 = tpu.memref_slice %arg7[%9, %c2_i32_17, %c0_i32_20] : memref<2x8x128xf32, #tpu.memory_space<vmem>> -> memref<1x1x128xf32, #tpu.memory_space<vmem>>
    %32 = tpu.memref_squeeze %31 : memref<1x1x128xf32, #tpu.memory_space<vmem>> -> memref<1x128xf32, #tpu.memory_space<vmem>>
    %33 = tpu.memref_slice %arg8[%9] : memref<2x!tpu.dma_semaphore, #tpu.memory_space<semaphore_mem>> -> memref<1x!tpu.dma_semaphore, #tpu.memory_space<semaphore_mem>>
    %34 = tpu.memref_squeeze %33 : memref<1x!tpu.dma_semaphore, #tpu.memory_space<semaphore_mem>> -> memref<!tpu.dma_semaphore, #tpu.memory_space<semaphore_mem>>
    tpu.wait_dma2 semaphore(%34 : memref<!tpu.dma_semaphore, #tpu.memory_space<semaphore_mem>>) src(%30 : memref<1x128xf32, #tpu.memory_space<any>>) dst(%32 : memref<1x128xf32, #tpu.memory_space<vmem>>)
    %c3_i32 = arith.constant 3 : i32
    %c0_i32_21 = arith.constant 0 : i32
    %c0_i32_22 = arith.constant 0 : i32
    %35 = tpu.memref_slice %arg3[%c0_i32_21, %c0_i32_22] : memref<48x128xf32, #tpu.memory_space<any>> -> memref<1x128xf32, #tpu.memory_space<any>>
    %c0_i32_23 = arith.constant 0 : i32
    %36 = tpu.memref_slice %arg7[%9, %c3_i32, %c0_i32_23] : memref<2x8x128xf32, #tpu.memory_space<vmem>> -> memref<1x1x128xf32, #tpu.memory_space<vmem>>
    %37 = tpu.memref_squeeze %36 : memref<1x1x128xf32, #tpu.memory_space<vmem>> -> memref<1x128xf32, #tpu.memory_space<vmem>>
    %38 = tpu.memref_slice %arg8[%9] : memref<2x!tpu.dma_semaphore, #tpu.memory_space<semaphore_mem>> -> memref<1x!tpu.dma_semaphore, #tpu.memory_space<semaphore_mem>>
    %39 = tpu.memref_squeeze %38 : memref<1x!tpu.dma_semaphore, #tpu.memory_space<semaphore_mem>> -> memref<!tpu.dma_semaphore, #tpu.memory_space<semaphore_mem>>
    tpu.wait_dma2 semaphore(%39 : memref<!tpu.dma_semaphore, #tpu.memory_space<semaphore_mem>>) src(%35 : memref<1x128xf32, #tpu.memory_space<any>>) dst(%37 : memref<1x128xf32, #tpu.memory_space<vmem>>)
    %c4_i32 = arith.constant 4 : i32
    %c0_i32_24 = arith.constant 0 : i32
    %c0_i32_25 = arith.constant 0 : i32
    %40 = tpu.memref_slice %arg3[%c0_i32_24, %c0_i32_25] : memref<48x128xf32, #tpu.memory_space<any>> -> memref<1x128xf32, #tpu.memory_space<any>>
    %c0_i32_26 = arith.constant 0 : i32
    %41 = tpu.memref_slice %arg7[%9, %c4_i32, %c0_i32_26] : memref<2x8x128xf32, #tpu.memory_space<vmem>> -> memref<1x1x128xf32, #tpu.memory_space<vmem>>
    %42 = tpu.memref_squeeze %41 : memref<1x1x128xf32, #tpu.memory_space<vmem>> -> memref<1x128xf32, #tpu.memory_space<vmem>>
    %43 = tpu.memref_slice %arg8[%9] : memref<2x!tpu.dma_semaphore, #tpu.memory_space<semaphore_mem>> -> memref<1x!tpu.dma_semaphore, #tpu.memory_space<semaphore_mem>>
    %44 = tpu.memref_squeeze %43 : memref<1x!tpu.dma_semaphore, #tpu.memory_space<semaphore_mem>> -> memref<!tpu.dma_semaphore, #tpu.memory_space<semaphore_mem>>
    tpu.wait_dma2 semaphore(%44 : memref<!tpu.dma_semaphore, #tpu.memory_space<semaphore_mem>>) src(%40 : memref<1x128xf32, #tpu.memory_space<any>>) dst(%42 : memref<1x128xf32, #tpu.memory_space<vmem>>)
    %c5_i32 = arith.constant 5 : i32
    %c0_i32_27 = arith.constant 0 : i32
    %c0_i32_28 = arith.constant 0 : i32
    %45 = tpu.memref_slice %arg3[%c0_i32_27, %c0_i32_28] : memref<48x128xf32, #tpu.memory_space<any>> -> memref<1x128xf32, #tpu.memory_space<any>>
    %c0_i32_29 = arith.constant 0 : i32
    %46 = tpu.memref_slice %arg7[%9, %c5_i32, %c0_i32_29] : memref<2x8x128xf32, #tpu.memory_space<vmem>> -> memref<1x1x128xf32, #tpu.memory_space<vmem>>
    %47 = tpu.memref_squeeze %46 : memref<1x1x128xf32, #tpu.memory_space<vmem>> -> memref<1x128xf32, #tpu.memory_space<vmem>>
    %48 = tpu.memref_slice %arg8[%9] : memref<2x!tpu.dma_semaphore, #tpu.memory_space<semaphore_mem>> -> memref<1x!tpu.dma_semaphore, #tpu.memory_space<semaphore_mem>>
    %49 = tpu.memref_squeeze %48 : memref<1x!tpu.dma_semaphore, #tpu.memory_space<semaphore_mem>> -> memref<!tpu.dma_semaphore, #tpu.memory_space<semaphore_mem>>
    tpu.wait_dma2 semaphore(%49 : memref<!tpu.dma_semaphore, #tpu.memory_space<semaphore_mem>>) src(%45 : memref<1x128xf32, #tpu.memory_space<any>>) dst(%47 : memref<1x128xf32, #tpu.memory_space<vmem>>)
    %c6_i32 = arith.constant 6 : i32
    %c0_i32_30 = arith.constant 0 : i32
    %c0_i32_31 = arith.constant 0 : i32
    %50 = tpu.memref_slice %arg3[%c0_i32_30, %c0_i32_31] : memref<48x128xf32, #tpu.memory_space<any>> -> memref<1x128xf32, #tpu.memory_space<any>>
    %c0_i32_32 = arith.constant 0 : i32
    %51 = tpu.memref_slice %arg7[%9, %c6_i32, %c0_i32_32] : memref<2x8x128xf32, #tpu.memory_space<vmem>> -> memref<1x1x128xf32, #tpu.memory_space<vmem>>
    %52 = tpu.memref_squeeze %51 : memref<1x1x128xf32, #tpu.memory_space<vmem>> -> memref<1x128xf32, #tpu.memory_space<vmem>>
    %53 = tpu.memref_slice %arg8[%9] : memref<2x!tpu.dma_semaphore, #tpu.memory_space<semaphore_mem>> -> memref<1x!tpu.dma_semaphore, #tpu.memory_space<semaphore_mem>>
    %54 = tpu.memref_squeeze %53 : memref<1x!tpu.dma_semaphore, #tpu.memory_space<semaphore_mem>> -> memref<!tpu.dma_semaphore, #tpu.memory_space<semaphore_mem>>
    tpu.wait_dma2 semaphore(%54 : memref<!tpu.dma_semaphore, #tpu.memory_space<semaphore_mem>>) src(%50 : memref<1x128xf32, #tpu.memory_space<any>>) dst(%52 : memref<1x128xf32, #tpu.memory_space<vmem>>)
    %c7_i32 = arith.constant 7 : i32
    %c0_i32_33 = arith.constant 0 : i32
    %c0_i32_34 = arith.constant 0 : i32
    %55 = tpu.memref_slice %arg3[%c0_i32_33, %c0_i32_34] : memref<48x128xf32, #tpu.memory_space<any>> -> memref<1x128xf32, #tpu.memory_space<any>>
    %c0_i32_35 = arith.constant 0 : i32
    %56 = tpu.memref_slice %arg7[%9, %c7_i32, %c0_i32_35] : memref<2x8x128xf32, #tpu.memory_space<vmem>> -> memref<1x1x128xf32, #tpu.memory_space<vmem>>
    %57 = tpu.memref_squeeze %56 : memref<1x1x128xf32, #tpu.memory_space<vmem>> -> memref<1x128xf32, #tpu.memory_space<vmem>>
    %58 = tpu.memref_slice %arg8[%9] : memref<2x!tpu.dma_semaphore, #tpu.memory_space<semaphore_mem>> -> memref<1x!tpu.dma_semaphore, #tpu.memory_space<semaphore_mem>>
    %59 = tpu.memref_squeeze %58 : memref<1x!tpu.dma_semaphore, #tpu.memory_space<semaphore_mem>> -> memref<!tpu.dma_semaphore, #tpu.memory_space<semaphore_mem>>
    tpu.wait_dma2 semaphore(%59 : memref<!tpu.dma_semaphore, #tpu.memory_space<semaphore_mem>>) src(%55 : memref<1x128xf32, #tpu.memory_space<any>>) dst(%57 : memref<1x128xf32, #tpu.memory_space<vmem>>)
    %c8_i32 = arith.constant 8 : i32
    %c0_i32_36 = arith.constant 0 : i32
    %60 = arith.cmpi sge, %12, %c0_i32_36 : i32
    %61 = arith.extui %60 : i1 to i32
    %c0_i32_37 = arith.constant 0 : i32
    %62 = arith.cmpi ne, %61, %c0_i32_37 : i32
    scf.if %62 {
      %71 = arith.index_cast %arg0 : i32 to index
      %c0_44 = arith.constant 0 : index
      %72 = vector.load %arg5[%71, %c0_44] : memref<2x128xf32, #tpu.memory_space<vmem>>, vector<1x128xf32>
      %73 = arith.index_cast %9 : i32 to index
      %74 = arith.index_cast %12 : i32 to index
      %c0_45 = arith.constant 0 : index
      %75 = vector.load %arg7[%73, %74, %c0_45] : memref<2x8x128xf32, #tpu.memory_space<vmem>>, vector<1x1x128xf32>
      %76 = vector.shape_cast %75 : vector<1x1x128xf32> to vector<1x128xf32>
      %77 = vector.shape_cast %72 : vector<1x128xf32> to vector<1x1x128xf32>
      tpu.vector_store %arg7[%73, %74, %c0_45], %77 {strides = array<i32>} : memref<2x8x128xf32, #tpu.memory_space<vmem>>, vector<1x1x128xf32>,
    } else {
    }
    %63 = arith.index_cast %9 : i32 to index
    %c0 = arith.constant 0 : index
    %c0_38 = arith.constant 0 : index
    %64 = vector.load %arg7[%63, %c0, %c0_38] : memref<2x8x128xf32, #tpu.memory_space<vmem>>, vector<1x8x128xf32>
    %65 = vector.shape_cast %64 : vector<1x8x128xf32> to vector<8x128xf32>
    %c0_39 = arith.constant 0 : index
    %c0_40 = arith.constant 0 : index
    %66 = vector.load %arg4[%c0_39, %c0_40] : memref<8x128xf32, #tpu.memory_space<vmem>>, vector<8x128xf32>
    %67 = arith.addf %65, %66 : vector<8x128xf32>
    %c0_41 = arith.constant 0 : index
    %c0_42 = arith.constant 0 : index
    %c0_43 = arith.constant 0 : index
    %68 = vector.load %arg6[%c0_41, %c0_42, %c0_43] : memref<1x8x128xf32, #tpu.memory_space<vmem>>, vector<1x8x128xf32>
    %69 = vector.shape_cast %68 : vector<1x8x128xf32> to vector<8x128xf32>
    %70 = vector.shape_cast %67 : vector<8x128xf32> to vector<1x8x128xf32>
    tpu.vector_store %arg6[%c0_41, %c0_42, %c0_43], %70 {strides = array<i32>} : memref<1x8x128xf32, #tpu.memory_space<vmem>>, vector<1x8x128xf32>,
    return
  }
  func.func @transform_1(%arg0: i32, %arg1: memref<16xi32, #tpu.memory_space<smem>>, %arg2: memref<2xi32, #tpu.memory_space<smem>>) -> (i32, i32) {
    %c0_i32 = arith.constant 0 : i32
    %c0_i32_0 = arith.constant 0 : i32
    %c0_i32_1 = arith.constant 0 : i32
    return %c0_i32, %c0_i32_0 : i32, i32
  }
  func.func @transform_2(%arg0: i32, %arg1: memref<16xi32, #tpu.memory_space<smem>>, %arg2: memref<2xi32, #tpu.memory_space<smem>>) -> (i32, i32) {
    %c0_i32 = arith.constant 0 : i32
    %c0_i32_0 = arith.constant 0 : i32
    %c0_i32_1 = arith.constant 0 : i32
    return %c0_i32, %c0_i32_0 : i32, i32
  }
  func.func @transform_3(%arg0: i32, %arg1: memref<16xi32, #tpu.memory_space<smem>>, %arg2: memref<2xi32, #tpu.memory_space<smem>>) -> (i32, i32, i32) {
    %c0_i32 = arith.constant 0 : i32
    %c0_i32_0 = arith.constant 0 : i32
    %c0_i32_1 = arith.constant 0 : i32
    return %arg0, %c0_i32, %c0_i32_0 : i32, i32, i32
  }
}

</mosaic_0001>

<llo_original>
// kernel: tpu_custom_call.1
$region0: #{tpu_custom_call.1}
  #allocation0 [shape = 'u32[]', space=smem, size = 0x4, offset = 0x4, fixed_abs, tag = 'smem constant byte address 0x4 - core index']
  #allocation1 [shape = 'u32[144,128]{1,0:T(1,128)}', space=vmem, size = 0x12000, scoped, tag = 'internal scratch']
  #allocation2 [shape = 'f32[2,8,128]{2,1,0:T(8,128)}', space=vmem, size = 0x2000, scoped, tag = 'scratch operand']
  #allocation3 [shape = 's32[2]{0}', space=sflag, size = 0x8, scoped, tag = 'scratch operand']
  #allocation4 [shape = 's32[1]{0}', space=sflag, size = 0x4, scoped, tag = 'scoped memory for tpu_custom_call.1']
  #allocation5 [shape = 'u8[512]{0}', space=smem, size = 0x200, scoped, tag = 'prefetched SMEM operand 0']
  #allocation6 [shape = 'u8[512]{0}', space=smem, size = 0x200, scoped, tag = 'prefetched SMEM operand 1']
  #allocation9 [shape = 's32[]', space=sflag, size = 0x4, offset = 0, fixed_abs, tag = 'sflag constant byte address 0x0 - dummy sync flag']
  #allocation10 [shape = 's32[]', space=sflag, size = 0x4, offset = 0, fixed_abs, tag = 'sflag constant byte address 0x0 - dummy sync flag']
  #allocation11 [shape = 'u32[]', space=smem, size = 0x4, offset = 0x44, fixed_abs, tag = 'smem constant byte address 0x44 - assertion arg 0']
  #allocation12 [shape = 'u32[]', space=smem, size = 0x4, offset = 0x48, fixed_abs, tag = 'smem constant byte address 0x48 - assertion arg 1']
  #allocation13 [shape = 's32[]', space=sflag, size = 0x4, offset = 0, fixed_abs, tag = 'sflag constant byte address 0x0 - dummy sync flag']
  #allocation14 [shape = 's32[]', space=sflag, size = 0x4, offset = 0, fixed_abs, tag = 'sflag constant byte address 0x0 - dummy sync flag']
  #allocation15 [shape = 's32[]', space=sflag, size = 0x4, offset = 0, fixed_abs, tag = 'sflag constant byte address 0x0 - dummy sync flag']
  #allocation16 [shape = 's32[]', space=sflag, size = 0x4, offset = 0, fixed_abs, tag = 'sflag constant byte address 0x0 - dummy sync flag']
  #allocation17 [shape = 's32[]', space=sflag, size = 0x4, offset = 0, fixed_abs, tag = 'sflag constant byte address 0x0 - dummy sync flag']
  #allocation18 [shape = 's32[]', space=sflag, size = 0x4, offset = 0, fixed_abs, tag = 'sflag constant byte address 0x0 - dummy sync flag']
  #allocation19 [shape = 's32[]', space=sflag, size = 0x4, offset = 0, fixed_abs, tag = 'sflag constant byte address 0x0 - dummy sync flag']
  #allocation20 [shape = 's32[]', space=sflag, size = 0x4, offset = 0, fixed_abs, tag = 'sflag constant byte address 0x0 - dummy sync flag']
  #allocation21 [shape = 's32[]', space=sflag, size = 0x4, offset = 0, fixed_abs, tag = 'sflag constant byte address 0x0 - dummy sync flag']
  #allocation22 [shape = 's32[]', space=sflag, size = 0x4, offset = 0, fixed_abs, tag = 'sflag constant byte address 0x0 - dummy sync flag']
  #allocation23 [shape = 's32[]', space=sflag, size = 0x4, offset = 0, fixed_abs, tag = 'sflag constant byte address 0x0 - dummy sync flag']
  #allocation24 [shape = 's32[]', space=sflag, size = 0x4, offset = 0, fixed_abs, tag = 'sflag constant byte address 0x0 - dummy sync flag']
  #allocation25 [shape = 's32[]', space=sflag, size = 0x4, offset = 0, fixed_abs, tag = 'sflag constant byte address 0x0 - dummy sync flag']
  #allocation26 [shape = 's32[]', space=sflag, size = 0x4, offset = 0, fixed_abs, tag = 'sflag constant byte address 0x0 - dummy sync flag']
  #allocation27 [shape = 's32[]', space=sflag, size = 0x4, offset = 0, fixed_abs, tag = 'sflag constant byte address 0x0 - dummy sync flag']
  #allocation28 [shape = 's32[]', space=sflag, size = 0x4, offset = 0, fixed_abs, tag = 'sflag constant byte address 0x0 - dummy sync flag']
  #allocation29 [shape = 's32[]', space=sflag, size = 0x4, offset = 0, fixed_abs, tag = 'sflag constant byte address 0x0 - dummy sync flag']
  #allocation30 [shape = 's32[]', space=sflag, size = 0x4, offset = 0, fixed_abs, tag = 'sflag constant byte address 0x0 - dummy sync flag']
  #allocation31 [shape = 's32[]', space=sflag, size = 0x4, offset = 0, fixed_abs, tag = 'sflag constant byte address 0x0 - dummy sync flag']
  #allocation32 [shape = 's32[]', space=sflag, size = 0x4, offset = 0, fixed_abs, tag = 'sflag constant byte address 0x0 - dummy sync flag']
  #allocation33 [shape = 's32[]', space=sflag, size = 0x4, offset = 0, fixed_abs, tag = 'sflag constant byte address 0x0 - dummy sync flag']
  #allocation34 [shape = 's32[]', space=sflag, size = 0x4, offset = 0, fixed_abs, tag = 'sflag constant byte address 0x0 - dummy sync flag']
  #allocation35 [shape = 's32[]', space=sflag, size = 0x4, offset = 0, fixed_abs, tag = 'sflag constant byte address 0x0 - dummy sync flag']
  #allocation36 [shape = 's32[]', space=sflag, size = 0x4, offset = 0, fixed_abs, tag = 'sflag constant byte address 0x0 - dummy sync flag']
  #allocation37 [shape = 's32[]', space=sflag, size = 0x4, offset = 0, fixed_abs, tag = 'sflag constant byte address 0x0 - dummy sync flag']
  #allocation38 [shape = 's32[]', space=sflag, size = 0x4, offset = 0, fixed_abs, tag = 'sflag constant byte address 0x0 - dummy sync flag']
  #allocation39 [shape = 's32[]', space=sflag, size = 0x4, offset = 0, fixed_abs, tag = 'sflag constant byte address 0x0 - dummy sync flag']
  #allocation40 [shape = 's32[]', space=sflag, size = 0x4, offset = 0, fixed_abs, tag = 'sflag constant byte address 0x0 - dummy sync flag']
  #allocation41 [shape = 's32[]', space=sflag, size = 0x4, offset = 0, fixed_abs, tag = 'sflag constant byte address 0x0 - dummy sync flag']
  #allocation42 [shape = 's32[]', space=sflag, size = 0x4, offset = 0, fixed_abs, tag = 'sflag constant byte address 0x0 - dummy sync flag']
  %s0 = inlined_call_operand.hbm [shape: s32[16], index: 0, kind: input, shape index: {}]
  %s1 = inlined_call_operand.vmem [shape: s32[2], index: 1, kind: input, shape index: {}]
  %s2 = inlined_call_operand.hbm [shape: f32[48,128], index: 2, kind: input, shape index: {}]
  %s3 = inlined_call_operand.vmem [shape: f32[8,128], index: 3, kind: input, shape index: {}]
  %s4 = inlined_call_operand.vmem [shape: f32[2,128], index: 4, kind: input, shape index: {}]
  %s5 = inlined_call_operand.hbm [shape: f32[2,8,128], index: 5, kind: output, shape index: {}]
  %s6 = sld [smem:[#allocation0]]
  $region117: #{tpu_custom_call.1} parent=0
    _
  %s8 = ssub.s32 1, %s6
  %s9 = scalar_select 0, %s8, %s6
  %11 = dma.hbm_to_smem %s0, 16, [#allocation5], [#allocation4]
  %s12 = sshll.u32 %s1, 4
  %s13 = int_to_ptr.vmem [resolvable:$true] %s12
  %15 = dma.vmem_to_smem %s13, 16, [#allocation6], [#allocation4]
  %16 = dma.done [#allocation4], 32
  %17 = sfence
  $region1: #{tpu_custom_call.1} parent=0
    #allocation7 [shape = 'u8[8192]{0}', space=vmem, size = 0x2000, scoped, tag = 'output window, operand 0']
    #allocation8 [shape = 's32[2]{0}', space=sflag, size = 0x8, scoped, tag = 'scoped memory for tpu_custom_call.1']
    %18 = vsyncpa [#allocation8], 0
    %s19 = scalar_lea.sflag [#allocation8], 1
    %20 = vsyncpa %s19, 0
    loop: start=0, step=1, limit=4
    $region2: #{tpu_custom_call.1} parent=1 // loop_pre_header
      _
    $region3: #{tpu_custom_call.1} parent=1 // loop_header
      %s22 = sphi 0, %s26
      %p23 = scmp.ge.s32.totalorder %s22, 4
      %s30 = sphi 0, %s30
      %s32 = sphi 0, %s30
      %s33 = sphi 0, %s32
      %s47 = sphi 0, %s33
      %s51 = sphi 0, %s51
      %s53 = sphi 0, %s51
      %s54 = sphi 0, %s53
      %s68 = sphi 0, %s54
      %s74 = sphi 0, %s76
      %s77 = sphi 0, %s74
      %s78 = sphi 0, %s77
      %s94 = sphi 0, %s78
    $region4: #{tpu_custom_call.1} parent=1 // loop_header_branch
      %25 = sbr.rel (%p23) target = $region8
    $region5: #{tpu_custom_call.1} parent=1 // loop_body
      %s27 = ssub.s32 %s22, 1
      %s28 = ssub.s32 %s22, 2
      %s29 = sadd.s32 %s22, 1
      %s31 = sadd.s32 %s30, 1
      %p34 = scmp.eq.s32.totalorder %s22, 1
      %p35 = scmp.ne.s32.totalorder %s30, %s32
      %p36 = scmp.eq.s32.totalorder %s22, 0
      %p37 = por %p35, %p36
      %p38 = scmp.ne.s32.totalorder %s30, %s32
      %p39 = scmp.eq.s32.totalorder %s27, 1
      %p40 = por %p38, %p39
      %p41 = scmp.ne.s32.totalorder %s32, %s33
      %p42 = scmp.eq.s32.totalorder %s27, 0
      %p43 = por %p41, %p42
      %p44 = scmp.ne.s32.totalorder %s32, %s33
      %p45 = scmp.eq.s32.totalorder %s28, 1
      %p46 = por %p44, %p45
      %p48 = scmp.ne.s32.totalorder %s33, %s47
      %p49 = scmp.eq.s32.totalorder %s28, 0
      %p50 = por %p48, %p49
      %s52 = sadd.s32 %s51, 1
      %p55 = scmp.eq.s32.totalorder %s22, 1
      %p56 = scmp.ne.s32.totalorder %s51, %s53
      %p57 = scmp.eq.s32.totalorder %s22, 0
      %p58 = por %p56, %p57
      %p59 = scmp.ne.s32.totalorder %s51, %s53
      %p60 = scmp.eq.s32.totalorder %s27, 1
      %p61 = por %p59, %p60
      %p62 = scmp.ne.s32.totalorder %s53, %s54
      %p63 = scmp.eq.s32.totalorder %s27, 0
      %p64 = por %p62, %p63
      %p65 = scmp.ne.s32.totalorder %s53, %s54
      %p66 = scmp.eq.s32.totalorder %s28, 1
      %p67 = por %p65, %p66
      %p69 = scmp.ne.s32.totalorder %s54, %s68
      %p70 = scmp.eq.s32.totalorder %s28, 0
      %p71 = por %p69, %p70
      %s72 = ssub.s32 %s22, %s29
      %p73 = scmp.eq.s32.totalorder %s72, 0
      %s75 = sadd.s32 %s74, 1
      %s76 = scalar_select %p73, %s74, %s75
      %p79 = pneg %p73
      %p80 = scmp.eq.s32.totalorder %s22, 1
      %p81 = por %p79, %p80
      %p82 = scmp.ne.s32.totalorder %s74, %s77
      %p83 = scmp.eq.s32.totalorder %s22, 0
      %p84 = por %p82, %p83
      %p85 = scmp.ne.s32.totalorder %s74, %s77
      %p86 = scmp.eq.s32.totalorder %s27, 1
      %p87 = por %p85, %p86
      %p88 = scmp.ne.s32.totalorder %s77, %s78
      %p89 = scmp.eq.s32.totalorder %s27, 0
      %p90 = por %p88, %p89
      %p91 = scmp.ne.s32.totalorder %s77, %s78
      %p92 = scmp.eq.s32.totalorder %s28, 1
      %p93 = por %p91, %p92
      %p95 = scmp.ne.s32.totalorder %s78, %s94
      %p96 = scmp.eq.s32.totalorder %s28, 0
      %p97 = por %p95, %p96
      %p98 = scmp.le.s32.totalorder 1, %s22
      %p99 = scmp.lt.s32.totalorder %s22, 3
      %p100 = pnand %p98, %p99
      %p101 = pneg %p100
      // Predicated region
      $region9: #{tpu_custom_call.1} parent=5 // pred_check
        _
      $region10: #{tpu_custom_call.1} parent=5 // pred_check_branch
        %103 = sbr.rel (%p100) target = $region12
      $region11: #{tpu_custom_call.1} parent=5 // pred_region
        %s104 = ssub.s32 %s22, 1
        // Predicated region
        $region13: #{tpu_custom_call.1} parent=11 // pred_check
          %p105 = pneg %p43
        $region14: #{tpu_custom_call.1} parent=11 // pred_check_branch
          %107 = sbr.rel (%p105) target = $region16
        $region15: #{tpu_custom_call.1} parent=11 // pred_region
          _
        $region16: #{tpu_custom_call.1} parent=11 // pred_fallthru
          _
        // Predicated region
        $region17: #{tpu_custom_call.1} parent=11 // pred_check
          %p108 = pneg %p64
        $region18: #{tpu_custom_call.1} parent=11 // pred_check_branch
          %110 = sbr.rel (%p108) target = $region20
        $region19: #{tpu_custom_call.1} parent=11 // pred_region
          _
        $region20: #{tpu_custom_call.1} parent=11 // pred_fallthru
          _
      $region12: #{tpu_custom_call.1} parent=5 // pred_fallthru
        _
      %p111 = scmp.lt.s32.totalorder %s22, 2
      // Predicated region
      $region21: #{tpu_custom_call.1} parent=5 // pred_check
        %p112 = pneg %p111
      $region22: #{tpu_custom_call.1} parent=5 // pred_check_branch
        %114 = sbr.rel (%p112) target = $region24
      $region23: #{tpu_custom_call.1} parent=5 // pred_region
        _
      $region24: #{tpu_custom_call.1} parent=5 // pred_fallthru
        _
      %p115 = scmp.le.s32.totalorder 1, %s22
      %p116 = scmp.lt.s32.totalorder %s22, 3
      %p117 = pnand %p115, %p116
      %p118 = pneg %p117
      // Predicated region
      $region25: #{tpu_custom_call.1} parent=5 // pred_check
        _
      $region26: #{tpu_custom_call.1} parent=5 // pred_check_branch
        %120 = sbr.rel (%p117) target = $region28
      $region27: #{tpu_custom_call.1} parent=5 // pred_region
        %s121 = ssub.s32 %s22, 1
        %p122 = pneg %p43
        %p123 = pneg %p40
        %p124 = pneg %p64
        %p125 = pneg %p61
        %p126 = pneg %p90
        %p127 = pneg %p87
        %s128 = sand.u32 %s77, 1
        %s129 = scalar_lea.sflag [#allocation8], %s128
        %s130 = sand.u32 %s77, 1
        %s131 = smul.addr %s130, 8
        %s132 = scalar_lea.vmem [#allocation7], %s131
        %p133 = scmp.lt.s32.totalorder %s27, 0
        %s134 = ssub.s32 0, %s27
        %s135 = scalar_select %p133, %s134, %s27
        %s136 = sand.u32 %s135, 1
        %s137 = ssub.s32 0, %s136
        %s138 = scalar_select %p133, %s137, %s136
        %p139 = scmp.ne.s32.totalorder %s138, 0
        %p140 = scmp.lt.s32.totalorder %s138, 0
        %p141 = pnand %p140, %p139
        %p142 = pneg %p141
        %s143 = sadd.s32 %s138, 2
        %s144 = scalar_select %p142, %s143, %s138
        %s145 = ssub.s32 1, %s144
        %s146 = sld [smem:[#allocation6 + %s27]]
        %p147 = scmp.eq.s32.totalorder %s27, 0
        // Predicated region
        $region29: #{tpu_custom_call.1} parent=27 // pred_check
          %p148 = pneg %p147
        $region30: #{tpu_custom_call.1} parent=27 // pred_check_branch
          %150 = sbr.rel (%p148) target = $region32
        $region31: #{tpu_custom_call.1} parent=27 // pred_region
          %s151 = sld [smem:[#allocation5]]
          %s152 = smul.addr %s151, 16
          %s153 = scalar_lea.hbm %s2, %s152
          %s154 = smul.u32 %s144, 8
          %s155 = scalar_lea.vmem [#allocation2], %s154
          %s156 = scalar_lea.sflag [#allocation3], %s144
          // Predicated region
          $region33: #{tpu_custom_call.1} parent=31 // pred_check
            _
          $region34: #{tpu_custom_call.1} parent=31 // pred_check_branch
            %158 = sbr.rel target = $region36
          $region35: #{tpu_custom_call.1} parent=31 // pred_region
            %159 = sst [smem:[#allocation11]] [#allocation10]
            %160 = sst [smem:[#allocation12]] [#allocation9]
          $region36: #{tpu_custom_call.1} parent=31 // pred_fallthru
            _
          %162 = shalt.err (0)
          %s164 = sshll.u32 %s155, 4
          %s165 = int_to_ptr.vmem [resolvable:$true] %s164
          %167 = dma.hbm_to_vmem [thread:$0]  %s153, 16, %s165, %s156
          %s168 = sld [smem:[#allocation5 + $0x1]]
          %s169 = smul.addr %s168, 16
          %s170 = scalar_lea.hbm %s2, %s169
          %s171 = sadd.s32 1, %s154
          %s172 = scalar_lea.vmem [#allocation2], %s171
          // Predicated region
          $region37: #{tpu_custom_call.1} parent=31 // pred_check
            _
          $region38: #{tpu_custom_call.1} parent=31 // pred_check_branch
            %174 = sbr.rel target = $region40
          $region39: #{tpu_custom_call.1} parent=31 // pred_region
            %175 = sst [smem:[#allocation11]] [#allocation14]
            %176 = sst [smem:[#allocation12]] [#allocation13]
          $region40: #{tpu_custom_call.1} parent=31 // pred_fallthru
            _
          %178 = shalt.err (0)
          %s180 = sshll.u32 %s172, 4
          %s181 = int_to_ptr.vmem [resolvable:$true] %s180
          %183 = dma.hbm_to_vmem [thread:$0]  %s170, 16, %s181, %s156
          %s184 = sld [smem:[#allocation5 + $0x2]]
          %s185 = smul.addr %s184, 16
          %s186 = scalar_lea.hbm %s2, %s185
          %s187 = sadd.s32 2, %s154
          %s188 = scalar_lea.vmem [#allocation2], %s187
          // Predicated region
          $region41: #{tpu_custom_call.1} parent=31 // pred_check
            _
          $region42: #{tpu_custom_call.1} parent=31 // pred_check_branch
            %190 = sbr.rel target = $region44
          $region43: #{tpu_custom_call.1} parent=31 // pred_region
            %191 = sst [smem:[#allocation11]] [#allocation16]
            %192 = sst [smem:[#allocation12]] [#allocation15]
          $region44: #{tpu_custom_call.1} parent=31 // pred_fallthru
            _
          %194 = shalt.err (0)
          %s196 = sshll.u32 %s188, 4
          %s197 = int_to_ptr.vmem [resolvable:$true] %s196
          %199 = dma.hbm_to_vmem [thread:$0]  %s186, 16, %s197, %s156
          %s200 = sld [smem:[#allocation5 + $0x3]]
          %s201 = smul.addr %s200, 16
          %s202 = scalar_lea.hbm %s2, %s201
          %s203 = sadd.s32 3, %s154
          %s204 = scalar_lea.vmem [#allocation2], %s203
          // Predicated region
          $region45: #{tpu_custom_call.1} parent=31 // pred_check
            _
          $region46: #{tpu_custom_call.1} parent=31 // pred_check_branch
            %206 = sbr.rel target = $region48
          $region47: #{tpu_custom_call.1} parent=31 // pred_region
            %207 = sst [smem:[#allocation11]] [#allocation18]
            %208 = sst [smem:[#allocation12]] [#allocation17]
          $region48: #{tpu_custom_call.1} parent=31 // pred_fallthru
            _
          %210 = shalt.err (0)
          %s212 = sshll.u32 %s204, 4
          %s213 = int_to_ptr.vmem [resolvable:$true] %s212
          %215 = dma.hbm_to_vmem [thread:$0]  %s202, 16, %s213, %s156
          %s216 = sld [smem:[#allocation5 + $0x4]]
          %s217 = smul.addr %s216, 16
          %s218 = scalar_lea.hbm %s2, %s217
          %s219 = sadd.s32 4, %s154
          %s220 = scalar_lea.vmem [#allocation2], %s219
          // Predicated region
          $region49: #{tpu_custom_call.1} parent=31 // pred_check
            _
          $region50: #{tpu_custom_call.1} parent=31 // pred_check_branch
            %222 = sbr.rel target = $region52
          $region51: #{tpu_custom_call.1} parent=31 // pred_region
            %223 = sst [smem:[#allocation11]] [#allocation20]
            %224 = sst [smem:[#allocation12]] [#allocation19]
          $region52: #{tpu_custom_call.1} parent=31 // pred_fallthru
            _
          %226 = shalt.err (0)
          %s228 = sshll.u32 %s220, 4
          %s229 = int_to_ptr.vmem [resolvable:$true] %s228
          %231 = dma.hbm_to_vmem [thread:$0]  %s218, 16, %s229, %s156
          %s232 = sld [smem:[#allocation5 + $0x5]]
          %s233 = smul.addr %s232, 16
          %s234 = scalar_lea.hbm %s2, %s233
          %s235 = sadd.s32 5, %s154
          %s236 = scalar_lea.vmem [#allocation2], %s235
          // Predicated region
          $region53: #{tpu_custom_call.1} parent=31 // pred_check
            _
          $region54: #{tpu_custom_call.1} parent=31 // pred_check_branch
            %238 = sbr.rel target = $region56
          $region55: #{tpu_custom_call.1} parent=31 // pred_region
            %239 = sst [smem:[#allocation11]] [#allocation22]
            %240 = sst [smem:[#allocation12]] [#allocation21]
          $region56: #{tpu_custom_call.1} parent=31 // pred_fallthru
            _
          %242 = shalt.err (0)
          %s244 = sshll.u32 %s236, 4
          %s245 = int_to_ptr.vmem [resolvable:$true] %s244
          %247 = dma.hbm_to_vmem [thread:$0]  %s234, 16, %s245, %s156
          %s248 = sld [smem:[#allocation5 + $0x6]]
          %s249 = smul.addr %s248, 16
          %s250 = scalar_lea.hbm %s2, %s249
          %s251 = sadd.s32 6, %s154
          %s252 = scalar_lea.vmem [#allocation2], %s251
          // Predicated region
          $region57: #{tpu_custom_call.1} parent=31 // pred_check
            _
          $region58: #{tpu_custom_call.1} parent=31 // pred_check_branch
            %254 = sbr.rel target = $region60
          $region59: #{tpu_custom_call.1} parent=31 // pred_region
            %255 = sst [smem:[#allocation11]] [#allocation24]
            %256 = sst [smem:[#allocation12]] [#allocation23]
          $region60: #{tpu_custom_call.1} parent=31 // pred_fallthru
            _
          %258 = shalt.err (0)
          %s260 = sshll.u32 %s252, 4
          %s261 = int_to_ptr.vmem [resolvable:$true] %s260
          %263 = dma.hbm_to_vmem [thread:$0]  %s250, 16, %s261, %s156
          %s264 = sld [smem:[#allocation5 + $0x7]]
          %s265 = smul.addr %s264, 16
          %s266 = scalar_lea.hbm %s2, %s265
          %s267 = sadd.s32 7, %s154
          %s268 = scalar_lea.vmem [#allocation2], %s267
          // Predicated region
          $region61: #{tpu_custom_call.1} parent=31 // pred_check
            _
          $region62: #{tpu_custom_call.1} parent=31 // pred_check_branch
            %270 = sbr.rel target = $region64
          $region63: #{tpu_custom_call.1} parent=31 // pred_region
            %271 = sst [smem:[#allocation11]] [#allocation26]
            %272 = sst [smem:[#allocation12]] [#allocation25]
          $region64: #{tpu_custom_call.1} parent=31 // pred_fallthru
            _
          %274 = shalt.err (0)
          %s276 = sshll.u32 %s268, 4
          %s277 = int_to_ptr.vmem [resolvable:$true] %s276
          %279 = dma.hbm_to_vmem [thread:$0]  %s266, 16, %s277, %s156
        $region32: #{tpu_custom_call.1} parent=27 // pred_fallthru
          _
        %s280 = sadd.s32 %s27, 1
        %p281 = scmp.lt.s32.totalorder %s280, 2
        // Predicated region
        $region65: #{tpu_custom_call.1} parent=27 // pred_check
          %p282 = pneg %p281
        $region66: #{tpu_custom_call.1} parent=27 // pred_check_branch
          %284 = sbr.rel (%p282) target = $region68
        $region67: #{tpu_custom_call.1} parent=27 // pred_region
          %s285 = smul.u32 %s280, 8
          %s286 = sld [smem:[#allocation5 + %s285]]
          %s287 = smul.addr %s286, 16
          %s288 = scalar_lea.hbm %s2, %s287
          %s289 = smul.u32 %s145, 8
          %s290 = scalar_lea.vmem [#allocation2], %s289
          %s291 = scalar_lea.sflag [#allocation3], %s145
          // Predicated region
          $region69: #{tpu_custom_call.1} parent=67 // pred_check
            _
          $region70: #{tpu_custom_call.1} parent=67 // pred_check_branch
            %293 = sbr.rel target = $region72
          $region71: #{tpu_custom_call.1} parent=67 // pred_region
            %294 = sst [smem:[#allocation11]] [#allocation28]
            %295 = sst [smem:[#allocation12]] [#allocation27]
          $region72: #{tpu_custom_call.1} parent=67 // pred_fallthru
            _
          %297 = shalt.err (0)
          %s299 = sshll.u32 %s290, 4
          %s300 = int_to_ptr.vmem [resolvable:$true] %s299
          %302 = dma.hbm_to_vmem [thread:$0]  %s288, 16, %s300, %s291
          %s303 = sadd.s32 %s285, 1
          %s304 = sld [smem:[#allocation5 + %s303]]
          %s305 = smul.addr %s304, 16
          %s306 = scalar_lea.hbm %s2, %s305
          %s307 = sadd.s32 1, %s289
          %s308 = scalar_lea.vmem [#allocation2], %s307
          // Predicated region
          $region73: #{tpu_custom_call.1} parent=67 // pred_check
            _
          $region74: #{tpu_custom_call.1} parent=67 // pred_check_branch
            %310 = sbr.rel target = $region76
          $region75: #{tpu_custom_call.1} parent=67 // pred_region
            %311 = sst [smem:[#allocation11]] [#allocation30]
            %312 = sst [smem:[#allocation12]] [#allocation29]
          $region76: #{tpu_custom_call.1} parent=67 // pred_fallthru
            _
          %314 = shalt.err (0)
          %s316 = sshll.u32 %s308, 4
          %s317 = int_to_ptr.vmem [resolvable:$true] %s316
          %319 = dma.hbm_to_vmem [thread:$0]  %s306, 16, %s317, %s291
          %s320 = sadd.s32 %s285, 2
          %s321 = sld [smem:[#allocation5 + %s320]]
          %s322 = smul.addr %s321, 16
          %s323 = scalar_lea.hbm %s2, %s322
          %s324 = sadd.s32 2, %s289
          %s325 = scalar_lea.vmem [#allocation2], %s324
          // Predicated region
          $region77: #{tpu_custom_call.1} parent=67 // pred_check
            _
          $region78: #{tpu_custom_call.1} parent=67 // pred_check_branch
            %327 = sbr.rel target = $region80
          $region79: #{tpu_custom_call.1} parent=67 // pred_region
            %328 = sst [smem:[#allocation11]] [#allocation32]
            %329 = sst [smem:[#allocation12]] [#allocation31]
          $region80: #{tpu_custom_call.1} parent=67 // pred_fallthru
            _
          %331 = shalt.err (0)
          %s333 = sshll.u32 %s325, 4
          %s334 = int_to_ptr.vmem [resolvable:$true] %s333
          %336 = dma.hbm_to_vmem [thread:$0]  %s323, 16, %s334, %s291
          %s337 = sadd.s32 %s285, 3
          %s338 = sld [smem:[#allocation5 + %s337]]
          %s339 = smul.addr %s338, 16
          %s340 = scalar_lea.hbm %s2, %s339
          %s341 = sadd.s32 3, %s289
          %s342 = scalar_lea.vmem [#allocation2], %s341
          // Predicated region
          $region81: #{tpu_custom_call.1} parent=67 // pred_check
            _
          $region82: #{tpu_custom_call.1} parent=67 // pred_check_branch
            %344 = sbr.rel target = $region84
          $region83: #{tpu_custom_call.1} parent=67 // pred_region
            %345 = sst [smem:[#allocation11]] [#allocation34]
            %346 = sst [smem:[#allocation12]] [#allocation33]
          $region84: #{tpu_custom_call.1} parent=67 // pred_fallthru
            _
          %348 = shalt.err (0)
          %s350 = sshll.u32 %s342, 4
          %s351 = int_to_ptr.vmem [resolvable:$true] %s350
          %353 = dma.hbm_to_vmem [thread:$0]  %s340, 16, %s351, %s291
          %s354 = sadd.s32 %s285, 4
          %s355 = sld [smem:[#allocation5 + %s354]]
          %s356 = smul.addr %s355, 16
          %s357 = scalar_lea.hbm %s2, %s356
          %s358 = sadd.s32 4, %s289
          %s359 = scalar_lea.vmem [#allocation2], %s358
          // Predicated region
          $region85: #{tpu_custom_call.1} parent=67 // pred_check
            _
          $region86: #{tpu_custom_call.1} parent=67 // pred_check_branch
            %361 = sbr.rel target = $region88
          $region87: #{tpu_custom_call.1} parent=67 // pred_region
            %362 = sst [smem:[#allocation11]] [#allocation36]
            %363 = sst [smem:[#allocation12]] [#allocation35]
          $region88: #{tpu_custom_call.1} parent=67 // pred_fallthru
            _
          %365 = shalt.err (0)
          %s367 = sshll.u32 %s359, 4
          %s368 = int_to_ptr.vmem [resolvable:$true] %s367
          %370 = dma.hbm_to_vmem [thread:$0]  %s357, 16, %s368, %s291
          %s371 = sadd.s32 %s285, 5
          %s372 = sld [smem:[#allocation5 + %s371]]
          %s373 = smul.addr %s372, 16
          %s374 = scalar_lea.hbm %s2, %s373
          %s375 = sadd.s32 5, %s289
          %s376 = scalar_lea.vmem [#allocation2], %s375
          // Predicated region
          $region89: #{tpu_custom_call.1} parent=67 // pred_check
            _
          $region90: #{tpu_custom_call.1} parent=67 // pred_check_branch
            %378 = sbr.rel target = $region92
          $region91: #{tpu_custom_call.1} parent=67 // pred_region
            %379 = sst [smem:[#allocation11]] [#allocation38]
            %380 = sst [smem:[#allocation12]] [#allocation37]
          $region92: #{tpu_custom_call.1} parent=67 // pred_fallthru
            _
          %382 = shalt.err (0)
          %s384 = sshll.u32 %s376, 4
          %s385 = int_to_ptr.vmem [resolvable:$true] %s384
          %387 = dma.hbm_to_vmem [thread:$0]  %s374, 16, %s385, %s291
          %s388 = sadd.s32 %s285, 6
          %s389 = sld [smem:[#allocation5 + %s388]]
          %s390 = smul.addr %s389, 16
          %s391 = scalar_lea.hbm %s2, %s390
          %s392 = sadd.s32 6, %s289
          %s393 = scalar_lea.vmem [#allocation2], %s392
          // Predicated region
          $region93: #{tpu_custom_call.1} parent=67 // pred_check
            _
          $region94: #{tpu_custom_call.1} parent=67 // pred_check_branch
            %395 = sbr.rel target = $region96
          $region95: #{tpu_custom_call.1} parent=67 // pred_region
            %396 = sst [smem:[#allocation11]] [#allocation40]
            %397 = sst [smem:[#allocation12]] [#allocation39]
          $region96: #{tpu_custom_call.1} parent=67 // pred_fallthru
            _
          %399 = shalt.err (0)
          %s401 = sshll.u32 %s393, 4
          %s402 = int_to_ptr.vmem [resolvable:$true] %s401
          %404 = dma.hbm_to_vmem [thread:$0]  %s391, 16, %s402, %s291
          %s405 = sadd.s32 %s285, 7
          %s406 = sld [smem:[#allocation5 + %s405]]
          %s407 = smul.addr %s406, 16
          %s408 = scalar_lea.hbm %s2, %s407
          %s409 = sadd.s32 7, %s289
          %s410 = scalar_lea.vmem [#allocation2], %s409
          // Predicated region
          $region97: #{tpu_custom_call.1} parent=67 // pred_check
            _
          $region98: #{tpu_custom_call.1} parent=67 // pred_check_branch
            %412 = sbr.rel target = $region100
          $region99: #{tpu_custom_call.1} parent=67 // pred_region
            %413 = sst [smem:[#allocation11]] [#allocation42]
            %414 = sst [smem:[#allocation12]] [#allocation41]
          $region100: #{tpu_custom_call.1} parent=67 // pred_fallthru
            _
          %416 = shalt.err (0)
          %s418 = sshll.u32 %s410, 4
          %s419 = int_to_ptr.vmem [resolvable:$true] %s418
          %421 = dma.hbm_to_vmem [thread:$0]  %s408, 16, %s419, %s291
        $region68: #{tpu_custom_call.1} parent=27 // pred_fallthru
          _
        %s422 = scalar_lea.sflag [#allocation3], %s144
        %s423 = smul.u32 1, 1
        %s424 = sshll.u32 %s423, 4
        %425 = dma.done %s422, %s424
        %s426 = sshll.u32 %s423, 4
        %427 = dma.done %s422, %s426
        %s428 = sshll.u32 %s423, 4
        %429 = dma.done %s422, %s428
        %s430 = sshll.u32 %s423, 4
        %431 = dma.done %s422, %s430
        %s432 = sshll.u32 %s423, 4
        %433 = dma.done %s422, %s432
        %s434 = sshll.u32 %s423, 4
        %435 = dma.done %s422, %s434
        %s436 = sshll.u32 %s423, 4
        %437 = dma.done %s422, %s436
        %s438 = sshll.u32 %s423, 4
        %439 = dma.done %s422, %s438
        %p440 = scmp.ge.s32.totalorder %s146, 0
        // Predicated region
        $region101: #{tpu_custom_call.1} parent=27 // pred_check
          %p441 = pneg %p440
        $region102: #{tpu_custom_call.1} parent=27 // pred_check_branch
          %443 = sbr.rel (%p441) target = $region104
        $region103: #{tpu_custom_call.1} parent=27 // pred_region
          %s444 = scalar_lea.vmem %s4, %s27
          %v445 = vld [vmem:[%s444] sm:$0x1]
          %s446 = smul.u32 %s144, 8
          %s447 = sadd.s32 %s146, %s446
          %s448 = scalar_lea.vmem [#allocation2], %s447
          %449 = vst [vmem:[%s448] sm:$0x1] %v445
        $region104: #{tpu_custom_call.1} parent=27 // pred_fallthru
          _
        %s450 = smul.u32 %s144, 8
        %s451 = scalar_lea.vmem [#allocation2], %s450
        %v452 = vld [vmem:[%s451] sm:$0xff]
        %v453 = vld [vmem:[%s3] sm:$0xff]
        %v454 = vadd.f32 %v452, %v453
        %455 = vst [vmem:[%s132] sm:$0xff] %v454
        %s456 = sand.u32 %s77, 1
        %s457 = scalar_lea.sflag [#allocation8], %s456
        %s458 = sand.u32 %s77, 1
        %s459 = smul.addr %s458, 8
        %s460 = scalar_lea.vmem [#allocation7], %s459
        // Predicated region
        $region105: #{tpu_custom_call.1} parent=27 // pred_check
          %p461 = pneg %p87
        $region106: #{tpu_custom_call.1} parent=27 // pred_check_branch
          %463 = sbr.rel (%p461) target = $region108
        $region107: #{tpu_custom_call.1} parent=27 // pred_region
          %s465 = ssub.s32 128, 128
          %466 = vsyncadd %s457, %s465
          %s467 = smul.addr %s27, 128
          %s468 = scalar_lea.hbm %s5, %s467
          %s470 = sshll.u32 %s460, 4
          %s471 = int_to_ptr.vmem [resolvable:$true] %s470
          %473 = dma.vmem_to_hbm [thread:$0]  %s471, 128, %s468, %s457
        $region108: #{tpu_custom_call.1} parent=27 // pred_fallthru
          _
      $region28: #{tpu_custom_call.1} parent=5 // pred_fallthru
        _
      %p474 = scmp.le.s32.totalorder 2, %s22
      // Predicated region
      $region109: #{tpu_custom_call.1} parent=5 // pred_check
        %p475 = pneg %p474
      $region110: #{tpu_custom_call.1} parent=5 // pred_check_branch
        %477 = sbr.rel (%p475) target = $region112
      $region111: #{tpu_custom_call.1} parent=5 // pred_region
        %s478 = ssub.s32 %s22, 2
        // Predicated region
        $region113: #{tpu_custom_call.1} parent=111 // pred_check
          %p479 = pneg %p93
        $region114: #{tpu_custom_call.1} parent=111 // pred_check_branch
          %481 = sbr.rel (%p479) target = $region116
        $region115: #{tpu_custom_call.1} parent=111 // pred_region
          %s482 = sand.u32 %s78, 1
          %s483 = scalar_lea.sflag [#allocation8], %s482
          %s484 = sand.u32 %s78, 1
          %s485 = smul.addr %s484, 8
          %s486 = scalar_lea.vmem [#allocation7], %s485
          %487 = dma.done %s483, 128
        $region116: #{tpu_custom_call.1} parent=111 // pred_fallthru
          _
      $region112: #{tpu_custom_call.1} parent=5 // pred_fallthru
        _
    $region6: #{tpu_custom_call.1} parent=1 // loop_footer
      %s26 = sadd.s32 1, %s22
    $region7: #{tpu_custom_call.1} parent=1 // loop_footer_branch
      %21 = sbr.rel target = $region3
    $region8: #{tpu_custom_call.1} parent=1 // loop_exit
      _
    %488 = vsyncpa [#allocation8], 1
    %s489 = scalar_lea.sflag [#allocation8], 1
    %490 = vsyncpa %s489, 1
  %491 = vsyncmov [#allocation3]
  %s492 = vpop.sfrf %491
  %p493 = scmp.eq.s32.totalorder %s492, 0
  %p494 = pneg %p493
  %496 = shalt.err (%p494)
  %s497 = scalar_lea.sflag [#allocation3], 1
  %498 = vsyncmov %s497
  %s499 = vpop.sfrf %498
  %p500 = scmp.eq.s32.totalorder %s499, 0
  %p501 = pneg %p500
  %503 = shalt.err (%p501)

</llo_original>
